<compile_context>
chip_gen: v7x
topology: tpu7x:2x2x1
jax: 0.10.0
libtpu: 0.0.40
codegen_flags: <defaults>
</compile_context>

<pallas_src>
import functools

import jax
import jax.numpy as jnp
from jax.experimental import pallas as pl
from jax.experimental.pallas import tpu as pltpu

_NUM_CORE_SPLIT = 2  # leading split axis (sharded across TCs on 2-core parts)


def _round_up(x, m):
    return ((x + m - 1) // m) * m


def _num_tensorcores():
    """Best-effort TensorCore-per-chip count; falls back to 1 (single-TC behaviour)."""
    try:
        info = pltpu.get_tpu_info()
    except Exception:
        return 1
    for attr in ("tensorcores_per_chip", "num_cores_per_chip", "num_tensorcores",
                 "num_cores", "core_count"):
        v = getattr(info, attr, None)
        if isinstance(v, int) and v > 0:
            return v
    return 1


def _select_tile(N, C, target_step_bytes, vmem_budget_bytes):
    """Pick lane-tile size and per-core step count.

    Returns (tile, steps_per_core, vmem_bytes_per_lane)."""
    srows = _round_up(max(C, 1), 8)  # sublane padding of each (C, tile) plane
    # stacked: 2 bufs x 4 planes x srows x 4B ; aux: 2 bufs x 8 x 4B ; acc: 2 x srows x 4B
    vmem_per_lane = (2 * 4 * srows + 2 * 8 + 2 * srows) * 4
    cap = max(128, (vmem_budget_bytes // vmem_per_lane) // 128 * 128)
    # target_step_bytes of stacked input (16*C bytes/sample) per grid step
    tile = _round_up(max(target_step_bytes // (16 * C), 128), 128)
    tile = min(tile, cap)
    per_core = -(-N // _NUM_CORE_SPLIT)
    steps = max(1, -(-per_core // tile))
    # shrink tile to just cover the work -> minimal tail padding
    tile = min(_round_up(-(-per_core // steps), 128), cap)
    return tile, steps, vmem_per_lane


def _hdr_loss_kernel(has_w, eps, stk_ref, aux_ref, loss_out_ref, reg_out_ref,
                     loss_acc, reg_acc):
    i = pl.program_id(1)

    @pl.when(i == 0)
    def _():
        loss_acc[...] = jnp.zeros_like(loss_acc)
        reg_acc[...] = jnp.zeros_like(reg_acc)

    ir = stk_ref[0]                 # (C, TILE) input real
    ii = stk_ref[1]                 # (C, TILE) input imag
    tr = stk_ref[2]                 # (C, TILE) target real
    ti = stk_ref[3]                 # (C, TILE) target imag
    aux = aux_ref[...]              # (R, TILE): row0 = factor*(1-filter)^2, row1 = weights
    reg_w = aux[0:1, :]

    er = ir - tr
    ei = ii - ti
    in_abs2 = ir * ir + ii * ii
    denom = jnp.sqrt(in_abs2) + eps
    x = denom * denom
    inv = pl.reciprocal(x, approx=True)    # EUP issue (free slot)
    inv = inv * (2.0 - x * inv)            # one Newton step -> ~full f32 accuracy

    loss = (er * er + ei * ei) * inv       # |error|^2 / (|input|+eps)^2
    if has_w:
        loss = loss * aux[1:2, :]
    # reg_error = input - input*filter => |reg_error|^2 = |input|^2 * (1-filter)^2
    reg = in_abs2 * reg_w * inv            # reg_w already includes `factor`

    # plain VPU accumulation; the single cross-lane reduce happens on the last step only
    loss_acc[...] += loss
    reg_acc[...] += reg

    @pl.when(i == pl.num_programs(1) - 1)
    def _():
        loss_out_ref[...] = jnp.full(loss_out_ref.shape, jnp.sum(loss_acc[...]),
                                     jnp.float32)
        reg_out_ref[...] = jnp.full(reg_out_ref.shape, jnp.sum(reg_acc[...]),
                                    jnp.float32)


@functools.partial(jax.jit, static_argnames=("sigma", "eps", "factor",
                                             "target_step_bytes",
                                             "vmem_budget_bytes", "core_parallel"))
def hdr_loss_ff(inp, target, kcoords, weights=None, *,
                sigma=1.0, eps=1e-3, factor=0.5,
                target_step_bytes=2 << 20,     # >=2 MiB of stacked input per grid step
                vmem_budget_bytes=24 << 20,    # safe on v5e/v6e (128 MiB) and v7x (64 MiB)
                core_parallel=None):
    """Pallas implementation of HDRLoss_FF.forward with reduce=True.

    inp, target: (N, C, 2) float32 ; kcoords: (N, 4) ; weights: (N,) or None.
    Returns (loss_mean + reg_mean, reg_mean), both float32 scalars.
    """
    N, C, two = inp.shape
    assert two == 2 and target.shape == inp.shape

    tile, steps, vmem_per_lane = _select_tile(N, C, int(target_step_bytes),
                                              int(vmem_budget_bytes))
    n_pad = _NUM_CORE_SPLIT * steps * tile

    f32 = jnp.float32
    # One fused stack+transpose+pad pass (under jit): rows = [in_re,in_im,tg_re,tg_im],
    # big sample axis N on lanes.  Zero-padded tail samples contribute exactly 0.
    both = jnp.stack([inp.astype(f32), target.astype(f32)], axis=0)      # (2, N, C, 2)
    stacked = jnp.transpose(both, (0, 3, 2, 1)).reshape(4, C, N)         # (4, C, N)
    stacked = jnp.pad(stacked, ((0, 0), (0, 0), (0, n_pad - N)))

    # Hoisted frequency filter: reg_w = factor * (1 - exp(-dist2/(2 sigma^2)))^2
    kc = kcoords.astype(f32)
    d2 = kc[:, 2] * kc[:, 2] + kc[:, 3] * kc[:, 3]
    filt = jnp.exp(d2 * (-1.0 / (2.0 * float(sigma) ** 2)))
    reg_w = (float(factor) * (1.0 - filt) * (1.0 - filt)).reshape(1, N)

    has_w = weights is not None
    if has_w:
        aux = jnp.concatenate([reg_w, weights.astype(f32).reshape(1, N)], axis=0)
    else:
        aux = reg_w
    r_aux = aux.shape[0]
    aux = jnp.pad(aux, ((0, 0), (0, n_pad - N)))

    in_specs = [
        pl.BlockSpec((4, C, tile), lambda c, i: (0, 0, c * steps + i)),
        pl.BlockSpec((r_aux, tile), lambda c, i: (0, c * steps + i)),
    ]
    out_spec = pl.BlockSpec((1, 8, 128), lambda c, i: (c, 0, 0))
    out_shape = jax.ShapeDtypeStruct((_NUM_CORE_SPLIT, 8, 128), f32)

    kernel = functools.partial(_hdr_loss_kernel, has_w, float(eps))

    # Only CORE_PARALLEL actually shards a grid axis across TensorCores on 2-TC parts;
    # plain "parallel" is kept on single-TC chips / when detection is unavailable.
    if core_parallel is None:
        core_parallel = (_num_tensorcores() == _NUM_CORE_SPLIT)
    if core_parallel and hasattr(pltpu, "CORE_PARALLEL"):
        dim_sem = (pltpu.CORE_PARALLEL, pltpu.ARBITRARY)
    else:
        dim_sem = ("parallel", "arbitrary")

    needed_vmem = vmem_per_lane * tile
    vmem_limit = int(min(64 << 20, max(32 << 20, needed_vmem + (8 << 20))))

    cost = pl.CostEstimate(
        flops=int(20 * N * C),
        transcendentals=int(2 * N * C),
        bytes_accessed=int((16 * C + 4 * r_aux) * N
                           + 2 * _NUM_CORE_SPLIT * 8 * 128 * 4))

    loss_out, reg_out = pl.pallas_call(
        kernel,
        out_shape=(out_shape, out_shape),
        grid_spec=pltpu.PrefetchScalarGridSpec(
            num_scalar_prefetch=0,
            grid=(_NUM_CORE_SPLIT, steps),
            in_specs=in_specs,
            out_specs=[out_spec, out_spec],
            scratch_shapes=[pltpu.VMEM((C, tile), f32),
                            pltpu.VMEM((C, tile), f32)],
        ),
        compiler_params=pltpu.CompilerParams(
            dimension_semantics=dim_sem,
            vmem_limit_bytes=vmem_limit),
        cost_estimate=cost,
    )(stacked, aux)

    n_elem = jnp.float32(N * C)
    loss_mean = jnp.sum(loss_out[:, 0, 0]) / n_elem
    reg_mean = jnp.sum(reg_out[:, 0, 0]) / n_elem
    return loss_mean + reg_mean, reg_mean


def _reference(inp, target, kcoords, weights, sigma, eps, factor):
    """Pure-JAX mirror of the PyTorch HDRLoss_FF.forward (reduce=True)."""
    dist2 = kcoords[..., 2] ** 2 + kcoords[..., 3] ** 2
    filt = jnp.exp(-dist2 / (2 * sigma ** 2))[..., None]        # (N, 1)
    ic = jax.lax.complex(inp[..., 0], inp[..., 1])              # (N, C)
    tc = jax.lax.complex(target[..., 0], target[..., 1])
    err = ic - tc
    loss = (jnp.abs(err) / (jnp.abs(ic) + eps)) ** 2
    if weights is not None:
        loss = loss * weights[..., None]
    reg_err = ic - ic * filt
    reg = factor * (jnp.abs(reg_err) / (jnp.abs(ic) + eps)) ** 2
    return loss.mean() + reg.mean(), reg.mean()


if __name__ == "__main__":
    sigma, eps, factor = 1.0, 1e-3, 0.5

    N, C = 3000, 4  # non-multiple-of-tile N exercises the zero-padded tail
    key = jax.random.PRNGKey(0)
    k1, k2, k3, k4 = jax.random.split(key, 4)
    inp = jax.random.normal(k1, (N, C, 2), jnp.float32)
    target = jax.random.normal(k2, (N, C, 2), jnp.float32)
    kcoords = jax.random.uniform(k3, (N, 4), jnp.float32, minval=-1.0, maxval=1.0)
    weights = jax.random.uniform(k4, (N,), jnp.float32, minval=0.5, maxval=1.5)

    ref_total, ref_reg = _reference(inp, target, kcoords, weights, sigma, eps, factor)
    ref_total2, ref_reg2 = _reference(inp, target, kcoords, None, sigma, eps, factor)

    # small per-step byte target so several inner grid steps exercise the accumulator path
    total, reg_mean = hdr_loss_ff(inp, target, kcoords, weights,
                                  sigma=sigma, eps=eps, factor=factor,
                                  target_step_bytes=64 * 1024)
    total = jax.block_until_ready(total)
    reg_mean = jax.block_until_ready(reg_mean)
    assert jnp.allclose(total, ref_total, rtol=1e-4, atol=1e-5), (total, ref_total)
    assert jnp.allclose(reg_mean, ref_reg, rtol=1e-4, atol=1e-5), (reg_mean, ref_reg)

    # default (large-tile) path, weights=None (no weight row in the aux stream at all)
    total2, reg2 = hdr_loss_ff(inp, target, kcoords, None,
                               sigma=sigma, eps=eps, factor=factor)
    total2 = jax.block_until_ready(total2)
    reg2 = jax.block_until_ready(reg2)
    assert jnp.allclose(total2, ref_total2, rtol=1e-4, atol=1e-5), (total2, ref_total2)
    assert jnp.allclose(reg2, ref_reg2, rtol=1e-4, atol=1e-5), (reg2, ref_reg2)

    print("KERNEL_OK")
</pallas_src>

<mosaic_0001>
module attributes {stable_mosaic.version = 11 : i64} {
  func.func @_hdr_loss_kernel(%arg0: i32, %arg1: i32, %arg2: memref<4x4x768xf32, #tpu.memory_space<vmem>>, %arg3: memref<2x768xf32, #tpu.memory_space<vmem>>, %arg4: memref<1x8x128xf32, #tpu.memory_space<vmem>>, %arg5: memref<1x8x128xf32, #tpu.memory_space<vmem>>, %arg6: memref<4x768xf32, #tpu.memory_space<vmem>>, %arg7: memref<4x768xf32, #tpu.memory_space<vmem>>) attributes {dimension_semantics = [#tpu.dimension_semantics<parallel>, #tpu.dimension_semantics<arbitrary>], iteration_bounds = array<i64: 2, 2>, scalar_prefetch = 0 : i64, scratch_operands = 2 : i64, tpu.core_type = #tpu.core_type<tc>, window_params = [{transform_indices = @transform_0, window_bounds = array<i64: 4, 4, 768>}, {transform_indices = @transform_1, window_bounds = array<i64: 2, 768>}, {transform_indices = @transform_2, window_bounds = array<i64: 1, 8, 128>}, {transform_indices = @transform_3, window_bounds = array<i64: 1, 8, 128>}]} {
    %c0_i32 = arith.constant 0 : i32
    %0 = arith.cmpi eq, %arg1, %c0_i32 : i32
    %1 = arith.extui %0 : i1 to i32
    %c0_i32_0 = arith.constant 0 : i32
    %2 = arith.cmpi ne, %1, %c0_i32_0 : i32
    scf.if %2 {
      %cst_21 = arith.constant 0.000000e+00 : f32
      %46 = vector.broadcast %cst_21 : f32 to vector<4x768xf32>
      %c0_22 = arith.constant 0 : index
      %c0_23 = arith.constant 0 : index
      %47 = vector.load %arg6[%c0_22, %c0_23] : memref<4x768xf32, #tpu.memory_space<vmem>>, vector<4x768xf32>
      tpu.vector_store %arg6[%c0_22, %c0_23], %46 {strides = array<i32>} : memref<4x768xf32, #tpu.memory_space<vmem>>, vector<4x768xf32>,
      %cst_24 = arith.constant 0.000000e+00 : f32
      %48 = vector.broadcast %cst_24 : f32 to vector<4x768xf32>
      %c0_25 = arith.constant 0 : index
      %c0_26 = arith.constant 0 : index
      %49 = vector.load %arg7[%c0_25, %c0_26] : memref<4x768xf32, #tpu.memory_space<vmem>>, vector<4x768xf32>
      tpu.vector_store %arg7[%c0_25, %c0_26], %48 {strides = array<i32>} : memref<4x768xf32, #tpu.memory_space<vmem>>, vector<4x768xf32>,
    } else {
    }
    %c0 = arith.constant 0 : index
    %c0_1 = arith.constant 0 : index
    %c0_2 = arith.constant 0 : index
    %3 = vector.load %arg2[%c0, %c0_1, %c0_2] : memref<4x4x768xf32, #tpu.memory_space<vmem>>, vector<1x4x768xf32>
    %4 = vector.shape_cast %3 : vector<1x4x768xf32> to vector<4x768xf32>
    %c1 = arith.constant 1 : index
    %c0_3 = arith.constant 0 : index
    %c0_4 = arith.constant 0 : index
    %5 = vector.load %arg2[%c1, %c0_3, %c0_4] : memref<4x4x768xf32, #tpu.memory_space<vmem>>, vector<1x4x768xf32>
    %6 = vector.shape_cast %5 : vector<1x4x768xf32> to vector<4x768xf32>
    %c2 = arith.constant 2 : index
    %c0_5 = arith.constant 0 : index
    %c0_6 = arith.constant 0 : index
    %7 = vector.load %arg2[%c2, %c0_5, %c0_6] : memref<4x4x768xf32, #tpu.memory_space<vmem>>, vector<1x4x768xf32>
    %8 = vector.shape_cast %7 : vector<1x4x768xf32> to vector<4x768xf32>
    %c3 = arith.constant 3 : index
    %c0_7 = arith.constant 0 : index
    %c0_8 = arith.constant 0 : index
    %9 = vector.load %arg2[%c3, %c0_7, %c0_8] : memref<4x4x768xf32, #tpu.memory_space<vmem>>, vector<1x4x768xf32>
    %10 = vector.shape_cast %9 : vector<1x4x768xf32> to vector<4x768xf32>
    %c0_9 = arith.constant 0 : index
    %c0_10 = arith.constant 0 : index
    %11 = vector.load %arg3[%c0_9, %c0_10] : memref<2x768xf32, #tpu.memory_space<vmem>>, vector<2x768xf32>
    %12 = vector.extract_strided_slice %11 {offsets = [0, 0], sizes = [1, 768], strides = [1, 1]} : vector<2x768xf32> to vector<1x768xf32>
    %13 = arith.subf %4, %8 : vector<4x768xf32>
    %14 = arith.subf %6, %10 : vector<4x768xf32>
    %15 = arith.mulf %4, %4 : vector<4x768xf32>
    %16 = arith.mulf %6, %6 : vector<4x768xf32>
    %17 = arith.addf %15, %16 : vector<4x768xf32>
    %18 = math.sqrt %17 : vector<4x768xf32>
    %cst = arith.constant 1.000000e-03 : f32
    %19 = vector.broadcast %cst : f32 to vector<4x768xf32>
    %20 = arith.addf %18, %19 : vector<4x768xf32>
    %21 = arith.mulf %20, %20 : vector<4x768xf32>
    %22 = tpu.reciprocal %21 {approx = true} : vector<4x768xf32> -> vector<4x768xf32>
    %23 = arith.mulf %21, %22 : vector<4x768xf32>
    %cst_11 = arith.constant 2.000000e+00 : f32
    %24 = vector.broadcast %cst_11 : f32 to vector<4x768xf32>
    %25 = arith.subf %24, %23 : vector<4x768xf32>
    %26 = arith.mulf %22, %25 : vector<4x768xf32>
    %27 = arith.mulf %13, %13 : vector<4x768xf32>
    %28 = arith.mulf %14, %14 : vector<4x768xf32>
    %29 = arith.addf %27, %28 : vector<4x768xf32>
    %30 = arith.mulf %29, %26 : vector<4x768xf32>
    %31 = vector.extract_strided_slice %11 {offsets = [1, 0], sizes = [1, 768], strides = [1, 1]} : vector<2x768xf32> to vector<1x768xf32>
    %32 = vector.broadcast %31 : vector<1x768xf32> to vector<4x768xf32>
    %33 = arith.mulf %30, %32 : vector<4x768xf32>
    %34 = vector.broadcast %12 : vector<1x768xf32> to vector<4x768xf32>
    %35 = arith.mulf %17, %34 : vector<4x768xf32>
    %36 = arith.mulf %35, %26 : vector<4x768xf32>
    %c0_12 = arith.constant 0 : index
    %c0_13 = arith.constant 0 : index
    %37 = vector.load %arg6[%c0_12, %c0_13] : memref<4x768xf32, #tpu.memory_space<vmem>>, vector<4x768xf32>
    %38 = arith.addf %37, %33 : vector<4x768xf32>
    %c0_14 = arith.constant 0 : index
    %c0_15 = arith.constant 0 : index
    %39 = vector.load %arg6[%c0_14, %c0_15] : memref<4x768xf32, #tpu.memory_space<vmem>>, vector<4x768xf32>
    tpu.vector_store %arg6[%c0_14, %c0_15], %38 {strides = array<i32>} : memref<4x768xf32, #tpu.memory_space<vmem>>, vector<4x768xf32>,
    %c0_16 = arith.constant 0 : index
    %c0_17 = arith.constant 0 : index
    %40 = vector.load %arg7[%c0_16, %c0_17] : memref<4x768xf32, #tpu.memory_space<vmem>>, vector<4x768xf32>
    %41 = arith.addf %40, %36 : vector<4x768xf32>
    %c0_18 = arith.constant 0 : index
    %c0_19 = arith.constant 0 : index
    %42 = vector.load %arg7[%c0_18, %c0_19] : memref<4x768xf32, #tpu.memory_space<vmem>>, vector<4x768xf32>
    tpu.vector_store %arg7[%c0_18, %c0_19], %41 {strides = array<i32>} : memref<4x768xf32, #tpu.memory_space<vmem>>, vector<4x768xf32>,
    %c1_i32 = arith.constant 1 : i32
    %43 = arith.cmpi eq, %arg1, %c1_i32 : i32
    %44 = arith.extui %43 : i1 to i32
    %c0_i32_20 = arith.constant 0 : i32
    %45 = arith.cmpi ne, %44, %c0_i32_20 : i32
    scf.if %45 {
      %c0_21 = arith.constant 0 : index
      %c0_22 = arith.constant 0 : index
      %46 = vector.load %arg6[%c0_21, %c0_22] : memref<4x768xf32, #tpu.memory_space<vmem>>, vector<4x768xf32>
      %47 = vector.shape_cast %46 : vector<4x768xf32> to vector<1x4x768xf32>
      %cst_23 = arith.constant dense<0.000000e+00> : vector<1xf32>
      %48 = vector.multi_reduction <add>, %47, %cst_23 [1, 2] : vector<1x4x768xf32> to vector<1xf32>
      %49 = vector.shape_cast %48 : vector<1xf32> to vector<1x1x1xf32>
      %50 = vector.extract %49[0, 0, 0] : f32 from vector<1x1x1xf32>
      %51 = vector.broadcast %50 : f32 to vector<1x8x128xf32>
      %c0_24 = arith.constant 0 : index
      %c0_25 = arith.constant 0 : index
      %c0_26 = arith.constant 0 : index
      %52 = vector.load %arg4[%c0_24, %c0_25, %c0_26] : memref<1x8x128xf32, #tpu.memory_space<vmem>>, vector<1x8x128xf32>
      tpu.vector_store %arg4[%c0_24, %c0_25, %c0_26], %51 {strides = array<i32>} : memref<1x8x128xf32, #tpu.memory_space<vmem>>, vector<1x8x128xf32>,
      %c0_27 = arith.constant 0 : index
      %c0_28 = arith.constant 0 : index
      %53 = vector.load %arg7[%c0_27, %c0_28] : memref<4x768xf32, #tpu.memory_space<vmem>>, vector<4x768xf32>
      %54 = vector.shape_cast %53 : vector<4x768xf32> to vector<1x4x768xf32>
      %cst_29 = arith.constant dense<0.000000e+00> : vector<1xf32>
      %55 = vector.multi_reduction <add>, %54, %cst_29 [1, 2] : vector<1x4x768xf32> to vector<1xf32>
      %56 = vector.shape_cast %55 : vector<1xf32> to vector<1x1x1xf32>
      %57 = vector.extract %56[0, 0, 0] : f32 from vector<1x1x1xf32>
      %58 = vector.broadcast %57 : f32 to vector<1x8x128xf32>
      %c0_30 = arith.constant 0 : index
      %c0_31 = arith.constant 0 : index
      %c0_32 = arith.constant 0 : index
      %59 = vector.load %arg5[%c0_30, %c0_31, %c0_32] : memref<1x8x128xf32, #tpu.memory_space<vmem>>, vector<1x8x128xf32>
      tpu.vector_store %arg5[%c0_30, %c0_31, %c0_32], %58 {strides = array<i32>} : memref<1x8x128xf32, #tpu.memory_space<vmem>>, vector<1x8x128xf32>,
    } else {
    }
    return
  }
  func.func @transform_0(%arg0: i32, %arg1: i32) -> (i32, i32, i32) {
    %c2_i32 = arith.constant 2 : i32
    %0 = arith.muli %arg0, %c2_i32 : i32
    %1 = arith.addi %0, %arg1 : i32
    %c0_i32 = arith.constant 0 : i32
    %c0_i32_0 = arith.constant 0 : i32
    %c0_i32_1 = arith.constant 0 : i32
    return %c0_i32, %c0_i32_0, %1 : i32, i32, i32
  }
  func.func @transform_1(%arg0: i32, %arg1: i32) -> (i32, i32) {
    %c2_i32 = arith.constant 2 : i32
    %0 = arith.muli %arg0, %c2_i32 : i32
    %1 = arith.addi %0, %arg1 : i32
    %c0_i32 = arith.constant 0 : i32
    %c0_i32_0 = arith.constant 0 : i32
    return %c0_i32, %1 : i32, i32
  }
  func.func @transform_2(%arg0: i32, %arg1: i32) -> (i32, i32, i32) {
    %c0_i32 = arith.constant 0 : i32
    %c0_i32_0 = arith.constant 0 : i32
    %c0_i32_1 = arith.constant 0 : i32
    return %arg0, %c0_i32, %c0_i32_0 : i32, i32, i32
  }
  func.func @transform_3(%arg0: i32, %arg1: i32) -> (i32, i32, i32) {
    %c0_i32 = arith.constant 0 : i32
    %c0_i32_0 = arith.constant 0 : i32
    %c0_i32_1 = arith.constant 0 : i32
    return %arg0, %c0_i32, %c0_i32_0 : i32, i32, i32
  }
}

</mosaic_0001>

<llo_original>
// kernel: hdr_loss_ff.1
$region0: #{hdr_loss_ff.1}
  #allocation0 [shape = 'u32[]', space=smem, size = 0x4, offset = 0x4, fixed_abs, tag = 'smem constant byte address 0x4 - core index']
  #allocation1 [shape = 'u32[144,128]{1,0:T(1,128)}', space=vmem, size = 0x12000, scoped, tag = 'internal scratch']
  #allocation2 [shape = 'f32[4,768]{1,0:T(4,128)}', space=vmem, size = 0x3000, scoped, tag = 'scratch operand']
  #allocation3 [shape = 'f32[4,768]{1,0:T(4,128)}', space=vmem, size = 0x3000, scoped, tag = 'scratch operand']
  %s0 = inlined_call_operand.vmem [shape: f32[4,4,3072], index: 0, kind: input, shape index: {}]
  %s1 = inlined_call_operand.vmem [shape: f32[2,3072], index: 1, kind: input, shape index: {}]
  %s2 = inlined_call_operand.vmem [shape: f32[2,8,128], index: 2, kind: output, shape index: {0}]
  %s3 = inlined_call_operand.vmem [shape: f32[2,8,128], index: 3, kind: output, shape index: {1}]
  %4 = xla_tuple %s2, %s3
  %s5 = sld [smem:[#allocation0]]
  $region80: #{hdr_loss_ff.1} parent=0
    _
  %s7 = ssub.s32 1, %s5
  %s8 = scalar_select 0, %s7, %s5
  $region1: #{hdr_loss_ff.1} parent=0
    #allocation4 [shape = 'u8[98304]{0}', space=vmem, size = 0x18000, scoped, tag = 'input window, operand 0']
    loop: start=0, step=1, limit=6
    $region2: #{hdr_loss_ff.1} parent=1 // loop_pre_header
      _
    $region3: #{hdr_loss_ff.1} parent=1 // loop_header
      %s10 = sphi 0, %s14
      %p11 = scmp.ge.s32.totalorder %s10, 6
      %s17 = sphi 0, %s29
      %s18 = sphi 0, %s25
      %s19 = sphi 0, %s17
      %s20 = sphi 0, %s18
      %s21 = sphi 0, %s19
      %s22 = sphi 0, %s20
      %s36 = sphi 0, %s38
      %s39 = sphi 0, %s36
      %s40 = sphi 0, %s39
      %s56 = sphi 0, %s40
      %s66 = sphi 0, %s68
      %s69 = sphi 0, %s66
      %s70 = sphi 0, %s69
      %s86 = sphi 0, %s70
      %s92 = sphi 0, %s94
      %s95 = sphi 0, %s92
      %s96 = sphi 0, %s95
      %s112 = sphi 0, %s96
      %s118 = sphi 0, %s120
      %s121 = sphi 0, %s118
      %s122 = sphi 0, %s121
      %s138 = sphi 0, %s122
    $region4: #{hdr_loss_ff.1} parent=1 // loop_header_branch
      %13 = sbr.rel (%p11) target = $region8
    $region5: #{hdr_loss_ff.1} parent=1 // loop_body
      %s15 = ssub.s32 %s10, 1
      %s16 = ssub.s32 %s10, 2
      %s23 = sadd.s32 1, %s18
      %p24 = scmp.ge.s32.totalorder %s23, 2
      %s25 = scalar_select %p24, 0, %s23
      %s26 = sadd.s32 1, %s17
      %s27 = scalar_select %p24, %s26, %s17
      %p28 = scmp.ge.s32.totalorder %s27, 2
      %s29 = scalar_select %p28, 0, %s27
      %s30 = smul.u32 %s17, 2
      %s31 = sadd.s32 %s30, %s18
      %s32 = smul.u32 %s29, 2
      %s33 = sadd.s32 %s32, %s25
      %s34 = ssub.s32 %s31, %s33
      %p35 = scmp.eq.s32.totalorder %s34, 0
      %s37 = sadd.s32 %s36, 1
      %s38 = scalar_select %p35, %s36, %s37
      %p41 = pneg %p35
      %p42 = scmp.eq.s32.totalorder %s10, 3
      %p43 = por %p41, %p42
      %p44 = scmp.ne.s32.totalorder %s36, %s39
      %p45 = scmp.eq.s32.totalorder %s10, 0
      %p46 = por %p44, %p45
      %p47 = scmp.ne.s32.totalorder %s36, %s39
      %p48 = scmp.eq.s32.totalorder %s15, 3
      %p49 = por %p47, %p48
      %p50 = scmp.ne.s32.totalorder %s39, %s40
      %p51 = scmp.eq.s32.totalorder %s15, 0
      %p52 = por %p50, %p51
      %p53 = scmp.ne.s32.totalorder %s39, %s40
      %p54 = scmp.eq.s32.totalorder %s16, 3
      %p55 = por %p53, %p54
      %p57 = scmp.ne.s32.totalorder %s40, %s56
      %p58 = scmp.eq.s32.totalorder %s16, 0
      %p59 = por %p57, %p58
      %s60 = smul.u32 %s17, 2
      %s61 = sadd.s32 %s60, %s18
      %s62 = smul.u32 %s29, 2
      %s63 = sadd.s32 %s62, %s25
      %s64 = ssub.s32 %s61, %s63
      %p65 = scmp.eq.s32.totalorder %s64, 0
      %s67 = sadd.s32 %s66, 1
      %s68 = scalar_select %p65, %s66, %s67
      %p71 = pneg %p65
      %p72 = scmp.eq.s32.totalorder %s10, 3
      %p73 = por %p71, %p72
      %p74 = scmp.ne.s32.totalorder %s66, %s69
      %p75 = scmp.eq.s32.totalorder %s10, 0
      %p76 = por %p74, %p75
      %p77 = scmp.ne.s32.totalorder %s66, %s69
      %p78 = scmp.eq.s32.totalorder %s15, 3
      %p79 = por %p77, %p78
      %p80 = scmp.ne.s32.totalorder %s69, %s70
      %p81 = scmp.eq.s32.totalorder %s15, 0
      %p82 = por %p80, %p81
      %p83 = scmp.ne.s32.totalorder %s69, %s70
      %p84 = scmp.eq.s32.totalorder %s16, 3
      %p85 = por %p83, %p84
      %p87 = scmp.ne.s32.totalorder %s70, %s86
      %p88 = scmp.eq.s32.totalorder %s16, 0
      %p89 = por %p87, %p88
      %s90 = ssub.s32 %s17, %s29
      %p91 = scmp.eq.s32.totalorder %s90, 0
      %s93 = sadd.s32 %s92, 1
      %s94 = scalar_select %p91, %s92, %s93
      %p97 = pneg %p91
      %p98 = scmp.eq.s32.totalorder %s10, 3
      %p99 = por %p97, %p98
      %p100 = scmp.ne.s32.totalorder %s92, %s95
      %p101 = scmp.eq.s32.totalorder %s10, 0
      %p102 = por %p100, %p101
      %p103 = scmp.ne.s32.totalorder %s92, %s95
      %p104 = scmp.eq.s32.totalorder %s15, 3
      %p105 = por %p103, %p104
      %p106 = scmp.ne.s32.totalorder %s95, %s96
      %p107 = scmp.eq.s32.totalorder %s15, 0
      %p108 = por %p106, %p107
      %p109 = scmp.ne.s32.totalorder %s95, %s96
      %p110 = scmp.eq.s32.totalorder %s16, 3
      %p111 = por %p109, %p110
      %p113 = scmp.ne.s32.totalorder %s96, %s112
      %p114 = scmp.eq.s32.totalorder %s16, 0
      %p115 = por %p113, %p114
      %s116 = ssub.s32 %s17, %s29
      %p117 = scmp.eq.s32.totalorder %s116, 0
      %s119 = sadd.s32 %s118, 1
      %s120 = scalar_select %p117, %s118, %s119
      %p123 = pneg %p117
      %p124 = scmp.eq.s32.totalorder %s10, 3
      %p125 = por %p123, %p124
      %p126 = scmp.ne.s32.totalorder %s118, %s121
      %p127 = scmp.eq.s32.totalorder %s10, 0
      %p128 = por %p126, %p127
      %p129 = scmp.ne.s32.totalorder %s118, %s121
      %p130 = scmp.eq.s32.totalorder %s15, 3
      %p131 = por %p129, %p130
      %p132 = scmp.ne.s32.totalorder %s121, %s122
      %p133 = scmp.eq.s32.totalorder %s15, 0
      %p134 = por %p132, %p133
      %p135 = scmp.ne.s32.totalorder %s121, %s122
      %p136 = scmp.eq.s32.totalorder %s16, 3
      %p137 = por %p135, %p136
      %p139 = scmp.ne.s32.totalorder %s122, %s138
      %p140 = scmp.eq.s32.totalorder %s16, 0
      %p141 = por %p139, %p140
      %p142 = scmp.le.s32.totalorder 1, %s10
      %p143 = scmp.lt.s32.totalorder %s10, 5
      %p144 = pnand %p142, %p143
      %p145 = pneg %p144
      // Predicated region
      $region9: #{hdr_loss_ff.1} parent=5 // pred_check
        _
      $region10: #{hdr_loss_ff.1} parent=5 // pred_check_branch
        %147 = sbr.rel (%p144) target = $region12
      $region11: #{hdr_loss_ff.1} parent=5 // pred_region
        %s148 = ssub.s32 %s10, 1
      $region12: #{hdr_loss_ff.1} parent=5 // pred_fallthru
        _
      %p149 = scmp.lt.s32.totalorder %s10, 4
      // Predicated region
      $region13: #{hdr_loss_ff.1} parent=5 // pred_check
        %p150 = pneg %p149
      $region14: #{hdr_loss_ff.1} parent=5 // pred_check_branch
        %152 = sbr.rel (%p150) target = $region16
      $region15: #{hdr_loss_ff.1} parent=5 // pred_region
        // Predicated region
        $region17: #{hdr_loss_ff.1} parent=15 // pred_check
          %p153 = pneg %p46
        $region18: #{hdr_loss_ff.1} parent=15 // pred_check_branch
          %155 = sbr.rel (%p153) target = $region20
        $region19: #{hdr_loss_ff.1} parent=15 // pred_region
          %s156 = sand.u32 %s36, 1
          %s157 = sand.u32 %s36, 1
          %s158 = smul.addr %s157, 96
          %s159 = scalar_lea.vmem [#allocation4], %s158
          %s160 = smul.u32 %s17, 2
          %s161 = sadd.s32 %s160, %s18
          %s162 = smul.u32 6, %s161
          %s163 = smul.addr %s162, 4
          %s164 = scalar_lea.vmem %s0, %s163
          // Predicated region
          $region21: #{hdr_loss_ff.1} parent=19 // pred_check
            _
          $region22: #{hdr_loss_ff.1} parent=19 // pred_check_branch
            %166 = sbr.rel (0) target = $region24
          $region23: #{hdr_loss_ff.1} parent=19 // pred_region
            // Predicated region
            $region25: #{hdr_loss_ff.1} parent=23 // pred_check
              _
            $region26: #{hdr_loss_ff.1} parent=23 // pred_check_branch
              %168 = sbr.rel (0) target = $region28
            $region27: #{hdr_loss_ff.1} parent=23 // pred_region
              loop: start=0, step=1, limit=1
              $region29: #{hdr_loss_ff.1} parent=27 // loop_pre_header
                _
              $region30: #{hdr_loss_ff.1} parent=27 // loop_header
                %s170 = sphi 0, %s174
                %p171 = scmp.ge.s32.totalorder %s170, 1
                %s175 = sphi %s164, %s164
                %s176 = sphi %s159, %s159
              $region31: #{hdr_loss_ff.1} parent=27 // loop_header_branch
                %173 = sbr.rel (%p171) target = $region35
              $region32: #{hdr_loss_ff.1} parent=27 // loop_body
                %v177 = vld [vmem:[%s175] sm:$0xff]
                %178 = vst [vmem:[%s176] sm:$0xff] %v177
                %v179 = vld [vmem:[%s175 + $0x8] sm:$0xff]
                %180 = vst [vmem:[%s176 + $0x8] sm:$0xff] %v179
                %v181 = vld [vmem:[%s175 + $0x10] sm:$0xff]
                %182 = vst [vmem:[%s176 + $0x10] sm:$0xff] %v181
                %v183 = vld [vmem:[%s175 + $0x60] sm:$0xff]
                %184 = vst [vmem:[%s176 + $0x18] sm:$0xff] %v183
                %v185 = vld [vmem:[%s175 + $0x68] sm:$0xff]
                %186 = vst [vmem:[%s176 + $0x20] sm:$0xff] %v185
                %v187 = vld [vmem:[%s175 + $0x70] sm:$0xff]
                %188 = vst [vmem:[%s176 + $0x28] sm:$0xff] %v187
                %v189 = vld [vmem:[%s175 + $0xc0] sm:$0xff]
                %190 = vst [vmem:[%s176 + $0x30] sm:$0xff] %v189
                %v191 = vld [vmem:[%s175 + $0xc8] sm:$0xff]
                %192 = vst [vmem:[%s176 + $0x38] sm:$0xff] %v191
                %v193 = vld [vmem:[%s175 + $0xd0] sm:$0xff]
                %194 = vst [vmem:[%s176 + $0x40] sm:$0xff] %v193
                %v195 = vld [vmem:[%s175 + $0x120] sm:$0xff]
                %196 = vst [vmem:[%s176 + $0x48] sm:$0xff] %v195
                %v197 = vld [vmem:[%s175 + $0x128] sm:$0xff]
                %198 = vst [vmem:[%s176 + $0x50] sm:$0xff] %v197
                %v199 = vld [vmem:[%s175 + $0x130] sm:$0xff]
                %200 = vst [vmem:[%s176 + $0x58] sm:$0xff] %v199
              $region33: #{hdr_loss_ff.1} parent=27 // loop_footer
                %s174 = sadd.s32 1, %s170
              $region34: #{hdr_loss_ff.1} parent=27 // loop_footer_branch
                %169 = sbr.rel target = $region30
              $region35: #{hdr_loss_ff.1} parent=27 // loop_exit
                _
            $region28: #{hdr_loss_ff.1} parent=23 // pred_fallthru
              _
            // Predicated region
            $region36: #{hdr_loss_ff.1} parent=23 // pred_check
              _
            $region37: #{hdr_loss_ff.1} parent=23 // pred_check_branch
              %202 = sbr.rel target = $region39
            $region38: #{hdr_loss_ff.1} parent=23 // pred_region
              _
            $region39: #{hdr_loss_ff.1} parent=23 // pred_fallthru
              _
          $region24: #{hdr_loss_ff.1} parent=19 // pred_fallthru
            _
          %203 = vnop
        $region20: #{hdr_loss_ff.1} parent=15 // pred_fallthru
          _
        // Predicated region
        $region40: #{hdr_loss_ff.1} parent=15 // pred_check
          %p204 = pneg %p76
        $region41: #{hdr_loss_ff.1} parent=15 // pred_check_branch
          %206 = sbr.rel (%p204) target = $region43
        $region42: #{hdr_loss_ff.1} parent=15 // pred_region
          %s207 = smul.u32 %s17, 2
          %s208 = sadd.s32 %s207, %s18
          %s209 = smul.u32 6, %s208
          %p210 = scmp.lt.s32.totalorder %s209, 23
          %s211 = scalar_select %p210, %s209, 23
          %s212 = smul.addr %s211, 2
          %s213 = scalar_lea.vmem %s1, %s212
          %s214 = smul.u32 %s17, 2
          %s215 = sadd.s32 %s214, %s18
          %s216 = smul.u32 6, %s215
        $region43: #{hdr_loss_ff.1} parent=15 // pred_fallthru
          _
      $region16: #{hdr_loss_ff.1} parent=5 // pred_fallthru
        _
      %p217 = scmp.le.s32.totalorder 1, %s10
      %p218 = scmp.lt.s32.totalorder %s10, 5
      %p219 = pnand %p217, %p218
      %p220 = pneg %p219
      // Predicated region
      $region44: #{hdr_loss_ff.1} parent=5 // pred_check
        _
      $region45: #{hdr_loss_ff.1} parent=5 // pred_check_branch
        %222 = sbr.rel (%p219) target = $region47
      $region46: #{hdr_loss_ff.1} parent=5 // pred_region
        %s223 = ssub.s32 %s10, 1
        %s224 = sand.u32 %s39, 1
        %s225 = sand.u32 %s39, 1
        %s226 = smul.addr %s225, 96
        %s227 = scalar_lea.vmem [#allocation4], %s226
        // Predicated region
        $region48: #{hdr_loss_ff.1} parent=46 // pred_check
          %p228 = pneg %p52
        $region49: #{hdr_loss_ff.1} parent=46 // pred_check_branch
          %230 = sbr.rel (%p228) target = $region51
        $region50: #{hdr_loss_ff.1} parent=46 // pred_region
          _
        $region51: #{hdr_loss_ff.1} parent=46 // pred_fallthru
          _
        %s231 = sand.u32 %s39, 1
        %s232 = sand.u32 %s39, 1
        %s233 = smul.addr %s232, 96
        %s234 = scalar_lea.vmem [#allocation4], %s233
        %p235 = pneg %p52
        %p236 = pneg %p49
        %s237 = smul.u32 %s19, 2
        %s238 = sadd.s32 %s237, %s20
        %s239 = smul.u32 6, %s238
        %p240 = scmp.lt.s32.totalorder %s239, 23
        %s241 = scalar_select %p240, %s239, 23
        %s242 = smul.addr %s241, 2
        %s243 = scalar_lea.vmem %s1, %s242
        %p244 = pneg %p82
        %p245 = pneg %p79
        %p246 = pneg %p108
        %p247 = pneg %p105
        %p248 = scmp.lt.s32.totalorder %s19, 1
        %s249 = scalar_select %p248, %s19, 1
        %s250 = smul.addr %s249, 8
        %s251 = scalar_lea.vmem %s2, %s250
        %p252 = pneg %p134
        %p253 = pneg %p131
        %p254 = scmp.lt.s32.totalorder %s19, 1
        %s255 = scalar_select %p254, %s19, 1
        %s256 = smul.addr %s255, 8
        %s257 = scalar_lea.vmem %s3, %s256
        %s258 = smul.u32 %s19, 2
        %s259 = sadd.s32 %s258, %s20
        %s260 = smul.u32 6, %s259
        %s261 = smul.u32 %s19, 2
        %s262 = sadd.s32 %s261, %s20
        %s263 = smul.u32 6, %s262
        %p264 = scmp.lt.s32.totalorder %s263, 23
        %s265 = scalar_select %p264, %s263, 23
        %s266 = smul.addr %s265, 2
        %s267 = scalar_lea.vmem %s1, %s266
        %s268 = smul.u32 %s19, 2
        %s269 = sadd.s32 %s268, %s20
        %s270 = smul.u32 6, %s269
        %p271 = scmp.lt.s32.totalorder %s19, 1
        %s272 = scalar_select %p271, %s19, 1
        %s273 = smul.addr %s272, 8
        %s274 = scalar_lea.vmem %s2, %s273
        %p275 = scmp.lt.s32.totalorder %s19, 1
        %s276 = scalar_select %p275, %s19, 1
        %s277 = smul.addr %s276, 8
        %s278 = scalar_lea.vmem %s3, %s277
        %p279 = scmp.eq.s32.totalorder %s20, 0
        // Predicated region
        $region52: #{hdr_loss_ff.1} parent=46 // pred_check
          %p280 = pneg %p279
        $region53: #{hdr_loss_ff.1} parent=46 // pred_check_branch
          %282 = sbr.rel (%p280) target = $region55
        $region54: #{hdr_loss_ff.1} parent=46 // pred_region
          %283 = vst [vmem:[#allocation2] sm:$0xff] 0.0
          %284 = vst [vmem:[#allocation2 + $0x8] sm:$0xff] 0.0
          %285 = vst [vmem:[#allocation2 + $0x10] sm:$0xff] 0.0
          %286 = vst [vmem:[#allocation3] sm:$0xff] 0.0
          %287 = vst [vmem:[#allocation3 + $0x8] sm:$0xff] 0.0
          %288 = vst [vmem:[#allocation3 + $0x10] sm:$0xff] 0.0
        $region55: #{hdr_loss_ff.1} parent=46 // pred_fallthru
          _
        %v289 = vld [vmem:[%s227] sm:$0xff]
        %v290 = vld [vmem:[%s227 + $0x8] sm:$0xff]
        %v291 = vld [vmem:[%s227 + $0x10] sm:$0xff]
        %s292 = scalar_lea.vmem %s227, 24 [#allocation4]
        %v293 = vld [vmem:[%s292] sm:$0xff]
        %v294 = vld [vmem:[%s292 + $0x8] sm:$0xff]
        %v295 = vld [vmem:[%s292 + $0x10] sm:$0xff]
        %s296 = scalar_lea.vmem %s227, 48 [#allocation4]
        %v297 = vld [vmem:[%s296] sm:$0xff]
        %v298 = vld [vmem:[%s296 + $0x8] sm:$0xff]
        %v299 = vld [vmem:[%s296 + $0x10] sm:$0xff]
        %s300 = scalar_lea.vmem %s227, 72 [#allocation4]
        %v301 = vld [vmem:[%s300] sm:$0xff]
        %v302 = vld [vmem:[%s300 + $0x8] sm:$0xff]
        %v303 = vld [vmem:[%s300 + $0x10] sm:$0xff]
        %v304 = vld [vmem:[%s267] sm:$0xff]
        %v305 = vld [vmem:[%s267 + $0x8] sm:$0xf]
        %v306 = vsub.f32 %v289, %v297
        %v307 = vsub.f32 %v290, %v298
        %v308 = vsub.f32 %v291, %v299
        %v309 = vsub.f32 %v293, %v301
        %v310 = vsub.f32 %v294, %v302
        %v311 = vsub.f32 %v295, %v303
        %v312 = vmul.f32 %v289, %v289
        %v313 = vmul.f32 %v290, %v290
        %v314 = vmul.f32 %v291, %v291
        %v315 = vmul.f32 %v293, %v293
        %v316 = vmul.f32 %v294, %v294
        %v317 = vmul.f32 %v295, %v295
        %v318 = vadd.f32 %v312, %v315
        %v319 = vadd.f32 %v313, %v316
        %v320 = vadd.f32 %v314, %v317
        %v321 = vrsqrt.pop %v318
        %v322 = vmul.f32 %v318, %v321
        %vm323 = vcmp.eq.f32.partialorder %v318, inf
        %v324 = vsel %vm323, %v318, %v322
        %vm325 = vcmp.eq.f32.partialorder %v318, 0.0
        %v326 = vand.u32 %v318, 2147483648
        %v327 = vsel %vm325, %v326, %v324
        %v328 = vrsqrt.pop %v319
        %v329 = vmul.f32 %v319, %v328
        %vm330 = vcmp.eq.f32.partialorder %v319, inf
        %v331 = vsel %vm330, %v319, %v329
        %vm332 = vcmp.eq.f32.partialorder %v319, 0.0
        %v333 = vand.u32 %v319, 2147483648
        %v334 = vsel %vm332, %v333, %v331
        %v335 = vrsqrt.pop %v320
        %v336 = vmul.f32 %v320, %v335
        %vm337 = vcmp.eq.f32.partialorder %v320, inf
        %v338 = vsel %vm337, %v320, %v336
        %vm339 = vcmp.eq.f32.partialorder %v320, 0.0
        %v340 = vand.u32 %v320, 2147483648
        %v341 = vsel %vm339, %v340, %v338
        %v342 = vadd.f32 %v327, 0.001
        %v343 = vadd.f32 %v334, 0.001
        %v344 = vadd.f32 %v341, 0.001
        %v345 = vmul.f32 %v342, %v342
        %v346 = vmul.f32 %v343, %v343
        %v347 = vmul.f32 %v344, %v344
        %v348 = vrcp.pop %v345
        %v349 = vrcp.pop %v346
        %v350 = vrcp.pop %v347
        %v351 = vmul.f32 %v345, %v348
        %v352 = vmul.f32 %v346, %v349
        %v353 = vmul.f32 %v347, %v350
        %v354 = vsub.f32 2.0, %v351
        %v355 = vsub.f32 2.0, %v352
        %v356 = vsub.f32 2.0, %v353
        %v357 = vmul.f32 %v348, %v354
        %v358 = vmul.f32 %v349, %v355
        %v359 = vmul.f32 %v350, %v356
        %v360 = vmul.f32 %v306, %v306
        %v361 = vmul.f32 %v307, %v307
        %v362 = vmul.f32 %v308, %v308
        %v363 = vmul.f32 %v309, %v309
        %v364 = vmul.f32 %v310, %v310
        %v365 = vmul.f32 %v311, %v311
        %v366 = vadd.f32 %v360, %v363
        %v367 = vadd.f32 %v361, %v364
        %v368 = vadd.f32 %v362, %v365
        %v369 = vmul.f32 %v366, %v357
        %v370 = vmul.f32 %v367, %v358
        %v371 = vmul.f32 %v368, %v359
        %v374 = vlaneseq
        %v375 = vshrl.u32 %v374, 7
        %v376 = vsub.s32 1, %v375
        %v377 = vrot.slane %v304, %v376
        %v378 = vlaneseq
        %v379 = vshrl.u32 %v378, 7
        %v380 = vsub.s32 3, %v379
        %v381 = vrot.slane %v304, %v380
        %v382 = vlaneseq
        %v383 = vshrl.u32 %v382, 7
        %v384 = vsub.s32 5, %v383
        %v385 = vrot.slane %v304, %v384
        %v386 = vlaneseq
        %v387 = vshrl.u32 %v386, 7
        %v388 = vsub.s32 7, %v387
        %v389 = vrot.slane %v304, %v388
        %v390 = vlaneseq
        %v391 = vshrl.u32 %v390, 7
        %v392 = vsub.s32 1, %v391
        %v393 = vrot.slane %v305, %v392
        %v394 = vlaneseq
        %v395 = vshrl.u32 %v394, 7
        %v396 = vsub.s32 3, %v395
        %v397 = vrot.slane %v305, %v396
        %v404 = vlaneseq
        %v405 = vshrl.u32 %v404, 7
        %v406 = vsub.s32 1, %v405
        %v407 = vrot.slane %v377, %v406
        %v408 = vlaneseq
        %v409 = vshrl.u32 %v408, 7
        %v410 = vsub.s32 1, %v409
        %v411 = vrot.slane %v381, %v410
        %v412 = vlaneseq
        %v413 = vshrl.u32 %v412, 7
        %v414 = vsub.s32 1, %v413
        %v415 = vrot.slane %v385, %v414
        %v416 = vlaneseq
        %v417 = vshrl.u32 %v416, 7
        %v418 = vsub.s32 1, %v417
        %v419 = vrot.slane %v389, %v418
        %v420 = vlaneseq
        %v421 = vshrl.u32 %v420, 7
        %v422 = vsub.s32 1, %v421
        %v423 = vrot.slane %v393, %v422
        %v424 = vlaneseq
        %v425 = vshrl.u32 %v424, 7
        %v426 = vsub.s32 1, %v425
        %v427 = vrot.slane %v397, %v426
        %v434 = vcombine.low %v407, %v411
        %v435 = vcombine.low %v415, %v419
        %v436 = vcombine.low %v423, %v427
        %v440 = vmul.f32 %v369, %v434
        %v441 = vmul.f32 %v370, %v435
        %v442 = vmul.f32 %v371, %v436
        %v443 = vlaneseq
        %v444 = vshrl.u32 %v443, 7
        %v445 = vsub.s32 0, %v444
        %v446 = vrot.slane %v304, %v445
        %v447 = vlaneseq
        %v448 = vshrl.u32 %v447, 7
        %v449 = vsub.s32 2, %v448
        %v450 = vrot.slane %v304, %v449
        %v451 = vlaneseq
        %v452 = vshrl.u32 %v451, 7
        %v453 = vsub.s32 4, %v452
        %v454 = vrot.slane %v304, %v453
        %v455 = vlaneseq
        %v456 = vshrl.u32 %v455, 7
        %v457 = vsub.s32 6, %v456
        %v458 = vrot.slane %v304, %v457
        %v459 = vlaneseq
        %v460 = vshrl.u32 %v459, 7
        %v461 = vsub.s32 0, %v460
        %v462 = vrot.slane %v305, %v461
        %v463 = vlaneseq
        %v464 = vshrl.u32 %v463, 7
        %v465 = vsub.s32 2, %v464
        %v466 = vrot.slane %v305, %v465
        %v473 = vlaneseq
        %v474 = vshrl.u32 %v473, 7
        %v475 = vsub.s32 0, %v474
        %v476 = vrot.slane %v446, %v475
        %v477 = vlaneseq
        %v478 = vshrl.u32 %v477, 7
        %v479 = vsub.s32 0, %v478
        %v480 = vrot.slane %v450, %v479
        %v481 = vlaneseq
        %v482 = vshrl.u32 %v481, 7
        %v483 = vsub.s32 0, %v482
        %v484 = vrot.slane %v454, %v483
        %v485 = vlaneseq
        %v486 = vshrl.u32 %v485, 7
        %v487 = vsub.s32 0, %v486
        %v488 = vrot.slane %v458, %v487
        %v489 = vlaneseq
        %v490 = vshrl.u32 %v489, 7
        %v491 = vsub.s32 0, %v490
        %v492 = vrot.slane %v462, %v491
        %v493 = vlaneseq
        %v494 = vshrl.u32 %v493, 7
        %v495 = vsub.s32 0, %v494
        %v496 = vrot.slane %v466, %v495
        %v503 = vcombine.low %v476, %v480
        %v504 = vcombine.low %v484, %v488
        %v505 = vcombine.low %v492, %v496
        %v509 = vmul.f32 %v318, %v503
        %v510 = vmul.f32 %v319, %v504
        %v511 = vmul.f32 %v320, %v505
        %v512 = vmul.f32 %v509, %v357
        %v513 = vmul.f32 %v510, %v358
        %v514 = vmul.f32 %v511, %v359
        %v515 = vld [vmem:[#allocation2] sm:$0xff]
        %v516 = vld [vmem:[#allocation2 + $0x8] sm:$0xff]
        %v517 = vld [vmem:[#allocation2 + $0x10] sm:$0xff]
        %v518 = vadd.f32 %v515, %v440
        %v519 = vadd.f32 %v516, %v441
        %v520 = vadd.f32 %v517, %v442
        %521 = vst [vmem:[#allocation2] sm:$0xff] %v518
        %522 = vst [vmem:[#allocation2 + $0x8] sm:$0xff] %v519
        %523 = vst [vmem:[#allocation2 + $0x10] sm:$0xff] %v520
        %v524 = vld [vmem:[#allocation3] sm:$0xff]
        %v525 = vld [vmem:[#allocation3 + $0x8] sm:$0xff]
        %v526 = vld [vmem:[#allocation3 + $0x10] sm:$0xff]
        %v527 = vadd.f32 %v524, %v512
        %v528 = vadd.f32 %v525, %v513
        %v529 = vadd.f32 %v526, %v514
        %530 = vst [vmem:[#allocation3] sm:$0xff] %v527
        %531 = vst [vmem:[#allocation3 + $0x8] sm:$0xff] %v528
        %532 = vst [vmem:[#allocation3 + $0x10] sm:$0xff] %v529
        %p533 = scmp.eq.s32.totalorder %s20, 1
        // Predicated region
        $region56: #{hdr_loss_ff.1} parent=46 // pred_check
          %p534 = pneg %p533
        $region57: #{hdr_loss_ff.1} parent=46 // pred_check_branch
          %536 = sbr.rel (%p534) target = $region59
        $region58: #{hdr_loss_ff.1} parent=46 // pred_region
          %v537 = vld [vmem:[#allocation2] sm:$0xff]
          %v538 = vld [vmem:[#allocation2 + $0x8] sm:$0xff]
          %v539 = vld [vmem:[#allocation2 + $0x10] sm:$0xff]
          %v543 = vcombine.high %v537, %v537
          %v544 = vcombine.high %v538, %v538
          %v545 = vcombine.high %v539, %v539
          %vm549 = vcmask 1043456
          %v550 = vsel %vm549, %v537, 0.0
          %v551 = vsel %vm549, %v543, 0.0
          %v552 = vadd.f32 %v550, %v551
          %v553 = vsel %vm549, %v538, 0.0
          %v554 = vadd.f32 %v552, %v553
          %v555 = vsel %vm549, %v544, 0.0
          %v556 = vadd.f32 %v554, %v555
          %v557 = vsel %vm549, %v539, 0.0
          %v558 = vadd.f32 %v556, %v557
          %v559 = vsel %vm549, %v545, 0.0
          %v560 = vadd.f32 %v558, %v559
          %561 = vadd.xlane.f32.xlu0 %v560
          %v562 = vpop.xlane.xlu0 %561
          %v563 = vrot.slane %v562, 4
          %v564 = vadd.f32 %v562, %v563
          %v565 = vrot.slane %v564, 2
          %v566 = vadd.f32 %v564, %v565
          %v567 = vrot.slane %v566, 1
          %v568 = vadd.f32 %v566, %v567
          %s569 = vtos %v568
          %v570 = vstv %s569
          %571 = vst [vmem:[%s274] sm:$0xff] %v570
          %v572 = vld [vmem:[#allocation3] sm:$0xff]
          %v573 = vld [vmem:[#allocation3 + $0x8] sm:$0xff]
          %v574 = vld [vmem:[#allocation3 + $0x10] sm:$0xff]
          %v578 = vcombine.high %v572, %v572
          %v579 = vcombine.high %v573, %v573
          %v580 = vcombine.high %v574, %v574
          %v584 = vsel %vm549, %v572, 0.0
          %v585 = vsel %vm549, %v578, 0.0
          %v586 = vadd.f32 %v584, %v585
          %v587 = vsel %vm549, %v573, 0.0
          %v588 = vadd.f32 %v586, %v587
          %v589 = vsel %vm549, %v579, 0.0
          %v590 = vadd.f32 %v588, %v589
          %v591 = vsel %vm549, %v574, 0.0
          %v592 = vadd.f32 %v590, %v591
          %v593 = vsel %vm549, %v580, 0.0
          %v594 = vadd.f32 %v592, %v593
          %595 = vadd.xlane.f32.xlu0 %v594
          %v596 = vpop.xlane.xlu0 %595
          %v597 = vrot.slane %v596, 4
          %v598 = vadd.f32 %v596, %v597
          %v599 = vrot.slane %v598, 2
          %v600 = vadd.f32 %v598, %v599
          %v601 = vrot.slane %v600, 1
          %v602 = vadd.f32 %v600, %v601
          %s603 = vtos %v602
          %v604 = vstv %s603
          %605 = vst [vmem:[%s278] sm:$0xff] %v604
        $region59: #{hdr_loss_ff.1} parent=46 // pred_fallthru
          _
        %p606 = scmp.lt.s32.totalorder %s19, 1
        %s607 = scalar_select %p606, %s19, 1
        %s608 = smul.addr %s607, 8
        %s609 = scalar_lea.vmem %s2, %s608
        %p610 = scmp.lt.s32.totalorder %s19, 1
        %s611 = scalar_select %p610, %s19, 1
        %s612 = smul.addr %s611, 8
        %s613 = scalar_lea.vmem %s3, %s612
        // Predicated region
        $region60: #{hdr_loss_ff.1} parent=46 // pred_check
          %p614 = pneg %p105
        $region61: #{hdr_loss_ff.1} parent=46 // pred_check_branch
          %616 = sbr.rel (%p614) target = $region63
        $region62: #{hdr_loss_ff.1} parent=46 // pred_region
          _
        $region63: #{hdr_loss_ff.1} parent=46 // pred_fallthru
          _
        // Predicated region
        $region64: #{hdr_loss_ff.1} parent=46 // pred_check
          %p617 = pneg %p131
        $region65: #{hdr_loss_ff.1} parent=46 // pred_check_branch
          %619 = sbr.rel (%p617) target = $region67
        $region66: #{hdr_loss_ff.1} parent=46 // pred_region
          _
        $region67: #{hdr_loss_ff.1} parent=46 // pred_fallthru
          _
      $region47: #{hdr_loss_ff.1} parent=5 // pred_fallthru
        _
      %p620 = scmp.le.s32.totalorder 2, %s10
      // Predicated region
      $region68: #{hdr_loss_ff.1} parent=5 // pred_check
        %p621 = pneg %p620
      $region69: #{hdr_loss_ff.1} parent=5 // pred_check_branch
        %623 = sbr.rel (%p621) target = $region71
      $region70: #{hdr_loss_ff.1} parent=5 // pred_region
        %s624 = ssub.s32 %s10, 2
        // Predicated region
        $region72: #{hdr_loss_ff.1} parent=70 // pred_check
          %p625 = pneg %p111
        $region73: #{hdr_loss_ff.1} parent=70 // pred_check_branch
          %627 = sbr.rel (%p625) target = $region75
        $region74: #{hdr_loss_ff.1} parent=70 // pred_region
          %p628 = scmp.lt.s32.totalorder %s21, 1
          %s629 = scalar_select %p628, %s21, 1
          %s630 = smul.addr %s629, 8
          %s631 = scalar_lea.vmem %s2, %s630
        $region75: #{hdr_loss_ff.1} parent=70 // pred_fallthru
          _
        // Predicated region
        $region76: #{hdr_loss_ff.1} parent=70 // pred_check
          %p632 = pneg %p137
        $region77: #{hdr_loss_ff.1} parent=70 // pred_check_branch
          %634 = sbr.rel (%p632) target = $region79
        $region78: #{hdr_loss_ff.1} parent=70 // pred_region
          %p635 = scmp.lt.s32.totalorder %s21, 1
          %s636 = scalar_select %p635, %s21, 1
          %s637 = smul.addr %s636, 8
          %s638 = scalar_lea.vmem %s3, %s637
        $region79: #{hdr_loss_ff.1} parent=70 // pred_fallthru
          _
      $region71: #{hdr_loss_ff.1} parent=5 // pred_fallthru
        _
    $region6: #{hdr_loss_ff.1} parent=1 // loop_footer
      %s14 = sadd.s32 1, %s10
    $region7: #{hdr_loss_ff.1} parent=1 // loop_footer_branch
      %9 = sbr.rel target = $region3
    $region8: #{hdr_loss_ff.1} parent=1 // loop_exit
      _

</llo_original>
